<compile_context>
chip_gen: v5e
topology: v5e:2x2
jax: 0.10.0
libtpu: 0.0.40
codegen_flags: <defaults>
</compile_context>

<pallas_src>
import jax
import jax.numpy as jnp
import numpy as np
from jax.experimental import pallas as pl
from jax.experimental.pallas import tpu as pltpu

LANE = 128  # TPU lane width; pad the Linear's tiny (4) output dim up to this


def _discrim_kernel(x_ref, w_ref, b_ref, out_ref):
    # x_ref : (B, N, H)   bf16   activations
    # w_ref : (H, 128)    bf16   Linear weight, pre-transposed [in, out] and zero-padded
    # b_ref : (1, 128)    f32    Linear bias, zero-padded
    # out   : (B, 128)    f32    lane-dense output (real logits live in columns [:4])
    x = x_ref[...]
    pooled = jnp.max(x, axis=1)                                           # (B, H)  max over dim=1
    y = jnp.dot(pooled, w_ref[...], preferred_element_type=jnp.float32)   # MXU, f32 accumulate
    out_ref[...] = y + b_ref[...]


def discrim_multi_forward(x, w_fc, b_fc):
    """x: (B, N, 256) f32;  w_fc: (256, 4) [in, out];  b_fc: (4,).  Returns (B, 4) f32."""
    B, N, H = x.shape
    n_out = w_fc.shape[1]

    # bf16 at the pallas_call boundary (activations + matmul weight); bias stays f32.
    x_bf = x.astype(jnp.bfloat16)
    w_pad = jnp.zeros((H, LANE), jnp.bfloat16).at[:, :n_out].set(w_fc.astype(jnp.bfloat16))
    b_pad = jnp.zeros((1, LANE), jnp.float32).at[:, :n_out].set(b_fc.reshape(1, -1))

    out = pl.pallas_call(
        _discrim_kernel,
        out_shape=jax.ShapeDtypeStruct((B, LANE), jnp.float32),
        grid=(1,),
        in_specs=[
            pl.BlockSpec((B, N, H), lambda i: (0, 0, 0)),
            pl.BlockSpec((H, LANE), lambda i: (0, 0)),
            pl.BlockSpec((1, LANE), lambda i: (0, 0)),
        ],
        out_specs=pl.BlockSpec((B, LANE), lambda i: (0, 0)),
        compiler_params=pltpu.CompilerParams(dimension_semantics=("parallel",)),
    )(x_bf, w_pad, b_pad)

    return out[:, :n_out]


# ---------------------------------------------------------------------------
# Pure-JAX f32 reference (mirrors the PyTorch forward) for validation
# ---------------------------------------------------------------------------
def reference_forward(x, w_fc, b_fc):
    pooled = jnp.max(x, axis=1)          # x.max(dim=1)[0]
    return pooled @ w_fc + b_fc          # last_fc


if __name__ == "__main__":
    B, N, H, NOUT = 2, 8, 256, 4         # Linear is hard-wired to 256 -> 4 in the module

    key = jax.random.PRNGKey(0)
    kx, kw, kb = jax.random.split(key, 3)

    x = jax.random.normal(kx, (B, N, H), jnp.float32)
    bound = 1.0 / np.sqrt(H)             # nn.Linear default init range
    w_fc = jax.random.uniform(kw, (H, NOUT), jnp.float32, minval=-bound, maxval=bound)
    b_fc = jax.random.uniform(kb, (NOUT,), jnp.float32, minval=-bound, maxval=bound)

    out = discrim_multi_forward(x, w_fc, b_fc)
    out = jax.block_until_ready(out)

    ref = reference_forward(x, w_fc, b_fc)
    assert out.shape == (B, NOUT)
    # bf16 matmul operands with f32 accumulation -> loosened tolerance vs f32 reference
    assert np.allclose(np.asarray(out), np.asarray(ref), atol=5e-2, rtol=5e-2), \
        "kernel/reference mismatch"
    print("KERNEL_OK")
</pallas_src>

<mosaic_0001>
module attributes {stable_mosaic.version = 11 : i64} {
  func.func @_discrim_kernel(%arg0: i32, %arg1: memref<2x8x256xbf16, #tpu.memory_space<vmem>>, %arg2: memref<256x128xbf16, #tpu.memory_space<vmem>>, %arg3: memref<1x128xf32, #tpu.memory_space<vmem>>, %arg4: memref<2x128xf32, #tpu.memory_space<vmem>>) attributes {dimension_semantics = [#tpu.dimension_semantics<parallel>], iteration_bounds = array<i64: 1>, scalar_prefetch = 0 : i64, scratch_operands = 0 : i64, tpu.core_type = #tpu.core_type<tc>, window_params = [{pipeline_mode = #tpu.pipeline_mode<synchronous>, transform_indices = @transform_0, window_bounds = array<i64: 2, 8, 256>}, {pipeline_mode = #tpu.pipeline_mode<synchronous>, transform_indices = @transform_1, window_bounds = array<i64: 256, 128>}, {pipeline_mode = #tpu.pipeline_mode<synchronous>, transform_indices = @transform_2, window_bounds = array<i64: 1, 128>}, {pipeline_mode = #tpu.pipeline_mode<synchronous>, transform_indices = @transform_3, window_bounds = array<i64: 2, 128>}]} {
    %c0 = arith.constant 0 : index
    %c0_0 = arith.constant 0 : index
    %c0_1 = arith.constant 0 : index
    %0 = vector.load %arg1[%c0, %c0_0, %c0_1] : memref<2x8x256xbf16, #tpu.memory_space<vmem>>, vector<2x8x256xbf16>
    %cst = arith.constant dense<0xFF80> : vector<2x256xbf16>
    %1 = vector.multi_reduction <maximumf>, %0, %cst [1] : vector<2x8x256xbf16> to vector<2x256xbf16>
    %c0_2 = arith.constant 0 : index
    %c0_3 = arith.constant 0 : index
    %2 = vector.load %arg2[%c0_2, %c0_3] : memref<256x128xbf16, #tpu.memory_space<vmem>>, vector<256x128xbf16>
    %cst_4 = arith.constant dense<0.000000e+00> : vector<2x128xf32>
    %3 = tpu.matmul %1, %2, %cst_4 {dimension_numbers = #tpu.dot_dimension_numbers<[1], [0], [0], [1], [0, 0, 1, 1], [], []>} : vector<2x256xbf16>, vector<256x128xbf16>, vector<2x128xf32> -> vector<2x128xf32>
    %c0_5 = arith.constant 0 : index
    %c0_6 = arith.constant 0 : index
    %4 = vector.load %arg3[%c0_5, %c0_6] : memref<1x128xf32, #tpu.memory_space<vmem>>, vector<1x128xf32>
    %5 = vector.broadcast %4 : vector<1x128xf32> to vector<2x128xf32>
    %6 = arith.addf %3, %5 : vector<2x128xf32>
    %c0_7 = arith.constant 0 : index
    %c0_8 = arith.constant 0 : index
    %7 = vector.load %arg4[%c0_7, %c0_8] : memref<2x128xf32, #tpu.memory_space<vmem>>, vector<2x128xf32>
    tpu.vector_store %arg4[%c0_7, %c0_8], %6 {strides = array<i32>} : memref<2x128xf32, #tpu.memory_space<vmem>>, vector<2x128xf32>,
    return
  }
  func.func @transform_0(%arg0: i32) -> (i32, i32, i32) {
    %c0_i32 = arith.constant 0 : i32
    %c0_i32_0 = arith.constant 0 : i32
    %c0_i32_1 = arith.constant 0 : i32
    %c0_i32_2 = arith.constant 0 : i32
    return %c0_i32, %c0_i32_0, %c0_i32_1 : i32, i32, i32
  }
  func.func @transform_1(%arg0: i32) -> (i32, i32) {
    %c0_i32 = arith.constant 0 : i32
    %c0_i32_0 = arith.constant 0 : i32
    %c0_i32_1 = arith.constant 0 : i32
    return %c0_i32, %c0_i32_0 : i32, i32
  }
  func.func @transform_2(%arg0: i32) -> (i32, i32) {
    %c0_i32 = arith.constant 0 : i32
    %c0_i32_0 = arith.constant 0 : i32
    %c0_i32_1 = arith.constant 0 : i32
    return %c0_i32, %c0_i32_0 : i32, i32
  }
  func.func @transform_3(%arg0: i32) -> (i32, i32) {
    %c0_i32 = arith.constant 0 : i32
    %c0_i32_0 = arith.constant 0 : i32
    %c0_i32_1 = arith.constant 0 : i32
    return %c0_i32, %c0_i32_0 : i32, i32
  }
}

</mosaic_0001>

<llo_original>
// kernel: tpu_custom_call.1
$region0: #{tpu_custom_call.1}
  #allocation0 [shape = 'u32[]', space=smem, size = 0x4, offset = 0x4, fixed_abs, tag = 'smem constant byte address 0x4 - core index']
  #allocation1 [shape = 'u32[72,128]{1,0:T(1,128)}', space=vmem, size = 0x9000, scoped, tag = 'internal scratch']
  %s0 = inlined_call_operand.hbm [shape: bf16[2,8,256], index: 0, kind: input, shape index: {}]
  %s1 = inlined_call_operand.hbm [shape: bf16[256,128], index: 1, kind: input, shape index: {}]
  %s2 = inlined_call_operand.vmem [shape: f32[1,128], index: 2, kind: input, shape index: {}]
  %s3 = inlined_call_operand.hbm [shape: f32[2,128], index: 3, kind: output, shape index: {}]
  %s4 = sld [smem:[#allocation0]]
  $region30: #{tpu_custom_call.1} parent=0
    _
  %s6 = ssub.s32 1, %s4
  %s7 = scalar_select 0, %s6, %s4
  $region1: #{tpu_custom_call.1} parent=0
    #allocation2 [shape = 'u8[8192]{0}', space=vmem, size = 0x2000, scoped, tag = 'input window, operand 0, single buffered']
    #allocation3 [shape = 's32[1]{0}', space=sflag, size = 0x4, scoped, tag = 'scoped memory for tpu_custom_call.1']
    #allocation4 [shape = 's32[1]{0}', space=sflag, size = 0x4, scoped, tag = 'scoped memory for tpu_custom_call.1']
    #allocation5 [shape = 'u8[65536]{0}', space=vmem, size = 0x10000, scoped, tag = 'input window, operand 1, single buffered']
    #allocation6 [shape = 's32[1]{0}', space=sflag, size = 0x4, scoped, tag = 'scoped memory for tpu_custom_call.1']
    #allocation7 [shape = 'u8[1024]{0}', space=vmem, size = 0x400, scoped, tag = 'output window, operand 0, single buffered']
    %8 = vsyncpa [#allocation3], 0
    %9 = vsyncpa [#allocation6], 0
    %10 = vsyncpa [#allocation4], 0
    // Predicated region
    $region2: #{tpu_custom_call.1} parent=1 // pred_check
      _
    $region3: #{tpu_custom_call.1} parent=1 // pred_check_branch
      %12 = sbr.rel (0) target = $region5
    $region4: #{tpu_custom_call.1} parent=1 // pred_region
      %14 = vsyncadd [#allocation3], 0
      %s15 = sshll.u32 %s0, 4
      %s16 = int_to_ptr.hbm [resolvable:$true] %s15
      %s17 = sshll.u32 [#allocation2], 4
      %s18 = int_to_ptr.vmem [resolvable:$true] %s17
      %23 = dma.hbm_to_vmem [thread:$0]  %s16, 256, %s18, [#allocation3], 128, 128, 8
    $region5: #{tpu_custom_call.1} parent=1 // pred_fallthru
      _
    // Predicated region
    $region6: #{tpu_custom_call.1} parent=1 // pred_check
      _
    $region7: #{tpu_custom_call.1} parent=1 // pred_check_branch
      %25 = sbr.rel (0) target = $region9
    $region8: #{tpu_custom_call.1} parent=1 // pred_region
      %27 = vsyncadd [#allocation6], 0
      %s28 = sshll.u32 %s1, 4
      %s29 = int_to_ptr.hbm [resolvable:$true] %s28
      %s30 = sshll.u32 [#allocation5], 4
      %s31 = int_to_ptr.vmem [resolvable:$true] %s30
      %36 = dma.hbm_to_vmem [thread:$0]  %s29, 2048, %s31, [#allocation6], 64, 64, 4
    $region9: #{tpu_custom_call.1} parent=1 // pred_fallthru
      _
    // Predicated region
    $region10: #{tpu_custom_call.1} parent=1 // pred_check
      _
    $region11: #{tpu_custom_call.1} parent=1 // pred_check_branch
      %38 = sbr.rel (0) target = $region13
    $region12: #{tpu_custom_call.1} parent=1 // pred_region
      _
    $region13: #{tpu_custom_call.1} parent=1 // pred_fallthru
      _
    // Predicated region
    $region14: #{tpu_custom_call.1} parent=1 // pred_check
      _
    $region15: #{tpu_custom_call.1} parent=1 // pred_check_branch
      %40 = sbr.rel (0) target = $region17
    $region16: #{tpu_custom_call.1} parent=1 // pred_region
      %42 = dma.done [#allocation3], 256
    $region17: #{tpu_custom_call.1} parent=1 // pred_fallthru
      _
    // Predicated region
    $region18: #{tpu_custom_call.1} parent=1 // pred_check
      _
    $region19: #{tpu_custom_call.1} parent=1 // pred_check_branch
      %44 = sbr.rel (0) target = $region21
    $region20: #{tpu_custom_call.1} parent=1 // pred_region
      %46 = dma.done [#allocation6], 2048
    $region21: #{tpu_custom_call.1} parent=1 // pred_fallthru
      _
    %v47 = vld [vmem:[#allocation2] sm:$0xff]
    %v48 = vld [vmem:[#allocation2 + $0x8] sm:$0xff]
    %v49 = vunpack.c.l.bf16 %v47
    %v50 = vunpack.c.h.bf16 %v47
    %v51 = vunpack.c.l.bf16 %v48
    %v52 = vunpack.c.h.bf16 %v48
    %v53 = vrot.slane %v49, 4
    %v54 = vmax.f32 %v49, %v53
    %v55 = vrot.slane %v54, 2
    %v56 = vmax.f32 %v54, %v55
    %v57 = vrot.slane %v56, 1
    %v58 = vmax.f32 %v56, %v57
    %v59 = vrot.slane %v50, 4
    %v60 = vmax.f32 %v50, %v59
    %v61 = vrot.slane %v60, 2
    %v62 = vmax.f32 %v60, %v61
    %v63 = vrot.slane %v62, 1
    %v64 = vmax.f32 %v62, %v63
    %v65 = vrot.slane %v51, 4
    %v66 = vmax.f32 %v51, %v65
    %v67 = vrot.slane %v66, 2
    %v68 = vmax.f32 %v66, %v67
    %v69 = vrot.slane %v68, 1
    %v70 = vmax.f32 %v68, %v69
    %v71 = vrot.slane %v52, 4
    %v72 = vmax.f32 %v52, %v71
    %v73 = vrot.slane %v72, 2
    %v74 = vmax.f32 %v72, %v73
    %v75 = vrot.slane %v74, 1
    %v76 = vmax.f32 %v74, %v75
    %v77 = vpack.c.bf16 %v58, %v58
    %v78 = vpack.c.bf16 %v64, %v64
    %v79 = vpack.c.bf16 %v70, %v70
    %v80 = vpack.c.bf16 %v76, %v76
    %v81 = vld [vmem:[#allocation5] sm:$0xf]
    %v82 = vld [vmem:[#allocation5 + $0x4] sm:$0xf]
    %v83 = vld [vmem:[#allocation5 + $0x8] sm:$0xf]
    %v84 = vld [vmem:[#allocation5 + $0xc] sm:$0xf]
    %v85 = vld [vmem:[#allocation5 + $0x10] sm:$0xf]
    %v86 = vld [vmem:[#allocation5 + $0x14] sm:$0xf]
    %v87 = vld [vmem:[#allocation5 + $0x18] sm:$0xf]
    %v88 = vld [vmem:[#allocation5 + $0x1c] sm:$0xf]
    %v89 = vld [vmem:[#allocation5 + $0x20] sm:$0xf]
    %v90 = vld [vmem:[#allocation5 + $0x24] sm:$0xf]
    %v91 = vld [vmem:[#allocation5 + $0x28] sm:$0xf]
    %v92 = vld [vmem:[#allocation5 + $0x2c] sm:$0xf]
    %v93 = vld [vmem:[#allocation5 + $0x30] sm:$0xf]
    %v94 = vld [vmem:[#allocation5 + $0x34] sm:$0xf]
    %v95 = vld [vmem:[#allocation5 + $0x38] sm:$0xf]
    %v96 = vld [vmem:[#allocation5 + $0x3c] sm:$0xf]
    %v97 = vld [vmem:[#allocation5 + $0x40] sm:$0xf]
    %v98 = vld [vmem:[#allocation5 + $0x44] sm:$0xf]
    %v99 = vld [vmem:[#allocation5 + $0x48] sm:$0xf]
    %v100 = vld [vmem:[#allocation5 + $0x4c] sm:$0xf]
    %v101 = vld [vmem:[#allocation5 + $0x50] sm:$0xf]
    %v102 = vld [vmem:[#allocation5 + $0x54] sm:$0xf]
    %v103 = vld [vmem:[#allocation5 + $0x58] sm:$0xf]
    %v104 = vld [vmem:[#allocation5 + $0x5c] sm:$0xf]
    %v105 = vld [vmem:[#allocation5 + $0x60] sm:$0xf]
    %v106 = vld [vmem:[#allocation5 + $0x64] sm:$0xf]
    %v107 = vld [vmem:[#allocation5 + $0x68] sm:$0xf]
    %v108 = vld [vmem:[#allocation5 + $0x6c] sm:$0xf]
    %v109 = vld [vmem:[#allocation5 + $0x70] sm:$0xf]
    %v110 = vld [vmem:[#allocation5 + $0x74] sm:$0xf]
    %v111 = vld [vmem:[#allocation5 + $0x78] sm:$0xf]
    %v112 = vld [vmem:[#allocation5 + $0x7c] sm:$0xf]
    %v113 = vld [vmem:[%s2] sm:$0x1]
    %v115 = vperm.slane %v113, 0
    %v121 = vunpack.c.l.b16 %v77
    %v122 = vunpack.c.l.b16 %v78
    %v123 = vunpack.c.l.b16 %v79
    %v124 = vunpack.c.l.b16 %v80
    %vm125 = vcmask 1041409
    %v126 = vsel %vm125, %v123, %v121
    %v127 = vsel %vm125, %v124, %v122
    %v128 = vpack.c.b16 %v126, %v126
    %v129 = vpack.c.b16 %v127, %v127
    %v164 = vunpack.c.l.b16 %v81
    %v165 = vunpack.c.l.b16 %v82
    %v166 = vunpack.c.l.b16 %v83
    %v167 = vunpack.c.l.b16 %v84
    %v168 = vunpack.c.l.b16 %v85
    %v169 = vunpack.c.l.b16 %v86
    %v170 = vunpack.c.l.b16 %v87
    %v171 = vunpack.c.l.b16 %v88
    %v172 = vunpack.c.l.b16 %v89
    %v173 = vunpack.c.l.b16 %v90
    %v174 = vunpack.c.l.b16 %v91
    %v175 = vunpack.c.l.b16 %v92
    %v176 = vunpack.c.l.b16 %v93
    %v177 = vunpack.c.l.b16 %v94
    %v178 = vunpack.c.l.b16 %v95
    %v179 = vunpack.c.l.b16 %v96
    %v180 = vunpack.c.l.b16 %v97
    %v181 = vunpack.c.l.b16 %v98
    %v182 = vunpack.c.l.b16 %v99
    %v183 = vunpack.c.l.b16 %v100
    %v184 = vunpack.c.l.b16 %v101
    %v185 = vunpack.c.l.b16 %v102
    %v186 = vunpack.c.l.b16 %v103
    %v187 = vunpack.c.l.b16 %v104
    %v188 = vunpack.c.l.b16 %v105
    %v189 = vunpack.c.l.b16 %v106
    %v190 = vunpack.c.l.b16 %v107
    %v191 = vunpack.c.l.b16 %v108
    %v192 = vunpack.c.l.b16 %v109
    %v193 = vunpack.c.l.b16 %v110
    %v194 = vunpack.c.l.b16 %v111
    %v195 = vunpack.c.l.b16 %v112
    %v196 = vpack.c.b16 %v165, %v164
    %v197 = vpack.c.b16 %v167, %v166
    %v198 = vpack.c.b16 %v169, %v168
    %v199 = vpack.c.b16 %v171, %v170
    %v200 = vpack.c.b16 %v173, %v172
    %v201 = vpack.c.b16 %v175, %v174
    %v202 = vpack.c.b16 %v177, %v176
    %v203 = vpack.c.b16 %v179, %v178
    %v204 = vpack.c.b16 %v181, %v180
    %v205 = vpack.c.b16 %v183, %v182
    %v206 = vpack.c.b16 %v185, %v184
    %v207 = vpack.c.b16 %v187, %v186
    %v208 = vpack.c.b16 %v189, %v188
    %v209 = vpack.c.b16 %v191, %v190
    %v210 = vpack.c.b16 %v193, %v192
    %v211 = vpack.c.b16 %v195, %v194
    %228 = vmatpush.bf16.msra.mxu0 %v203
    %229 = vmatpush.bf16.msra.mxu0 %v202
    %230 = vmatpush.bf16.msra.mxu0 %v201
    %231 = vmatpush.bf16.msra.mxu0 %v200
    %232 = vmatpush.bf16.msra.mxu0 %v199
    %233 = vmatpush.bf16.msra.mxu0 %v198
    %234 = vmatpush.bf16.msra.mxu0 %v197
    %235 = vmatpush.bf16.msra.mxu0 %v196
    %236 = vmatmul.bf16.gmra.mxu0 %v128
    %v237 = vpop.f32.mrf.mxu0
    %v238 = vadd.f32 %v115, %v237
    %v239 = vpop.f32.mrf.mxu0
    %240 = vdwg.mxu0
    %241 = vmatpush.bf16.msra.mxu0 %v211
    %242 = vmatpush.bf16.msra.mxu0 %v210
    %243 = vmatpush.bf16.msra.mxu0 %v209
    %244 = vmatpush.bf16.msra.mxu0 %v208
    %245 = vmatpush.bf16.msra.mxu0 %v207
    %246 = vmatpush.bf16.msra.mxu0 %v206
    %247 = vmatpush.bf16.msra.mxu0 %v205
    %248 = vmatpush.bf16.msra.mxu0 %v204
    %249 = vmatmul.bf16.gmra.mxu0 %v129
    %v250 = vpop.f32.mrf.mxu0
    %v251 = vadd.f32 %v238, %v250
    %v252 = vpop.f32.mrf.mxu0
    %253 = vdwg.mxu0
    %254 = vst [vmem:[#allocation7] sm:$0x3] %v251
    // Predicated region
    $region22: #{tpu_custom_call.1} parent=1 // pred_check
      _
    $region23: #{tpu_custom_call.1} parent=1 // pred_check_branch
      %256 = sbr.rel (0) target = $region25
    $region24: #{tpu_custom_call.1} parent=1 // pred_region
      %258 = vsyncadd [#allocation4], 0
      %s260 = sshll.u32 [#allocation7], 4
      %s261 = int_to_ptr.vmem [resolvable:$true] %s260
      %s262 = sshll.u32 %s3, 4
      %s263 = int_to_ptr.hbm [resolvable:$true] %s262
      %265 = dma.vmem_to_hbm [thread:$0]  %s261, 32, %s263, [#allocation4]
    $region25: #{tpu_custom_call.1} parent=1 // pred_fallthru
      _
    // Predicated region
    $region26: #{tpu_custom_call.1} parent=1 // pred_check
      _
    $region27: #{tpu_custom_call.1} parent=1 // pred_check_branch
      %267 = sbr.rel (0) target = $region29
    $region28: #{tpu_custom_call.1} parent=1 // pred_region
      %269 = dma.done [#allocation4], 32
    $region29: #{tpu_custom_call.1} parent=1 // pred_fallthru
      _
    %270 = vsyncpa [#allocation3], 1
    %271 = vsyncpa [#allocation6], 1
    %272 = vsyncpa [#allocation4], 1

</llo_original>
